<compile_context>
chip_gen: v5e
topology: v5e:2x2
jax: 0.10.0
libtpu: 0.0.40
codegen_flags: <defaults>
</compile_context>

<pallas_src>
import functools

import jax
import jax.numpy as jnp
from jax import lax
from jax.experimental import pallas as pl
from jax.experimental.pallas import tpu as pltpu


def _decoder_kernel(
    x_ref, ctx_ref, h0_ref,
    wih_ref, bih_ref,
    wf_ref, bf_ref,                 # fused [W_hh | W_q | W_sc], [b_hh | b_q | b_sc]
    wref_ref, bref_ref, v_ref,
    wslt_ref, bsl_ref,              # W_sl transposed [C, H/2], b_sl [1, C]
    logits_ref, cls_ref, hout_ref,
):
    B, H = h0_ref.shape
    T, _, L = logits_ref.shape
    C = cls_ref.shape[-1]
    H2 = wslt_ref.shape[-1]

    h0 = h0_ref[...]
    wf = wf_ref[...]                 # [H, 3H + H + H2]
    bf = bf_ref[...]                 # [1, 3H + H + H2]
    v = v_ref[...]                   # [1, H]
    wsl_t = wslt_ref[...]            # [C, H2]
    bsl = bsl_ref[...]               # [1, C]

    # ---- step-invariant work (hoisted out of the recurrence) -------------------------------
    # gates1 = x @ W_ih + b_ih : decoder_input is fed unchanged at every decode step.
    gates1 = jnp.dot(x_ref[...], wih_ref[...],
                     preferred_element_type=jnp.float32) + bih_ref[...]          # [B, 3H]
    i_r = gates1[:, 0:H]
    i_z = gates1[:, H:2 * H]
    i_n = gates1[:, 2 * H:3 * H]

    # e = ctx @ W_ref + b_ref : identical for every decode step (largest matmul, done once).
    e2 = jnp.dot(ctx_ref[...], wref_ref[...],
                 preferred_element_type=jnp.float32) + bref_ref[...]              # [B*L, H]
    e3 = e2.reshape(B, L, H)

    # Prime the one-step-ahead fused projection: only the W_hh slice of h0's projection is used.
    fused0 = jnp.dot(h0, wf, preferred_element_type=jnp.float32) + bf
    g2_0 = fused0[:, 0:3 * H]                                                     # [B, 3H]

    # ---- sequential GRU + pointer + classifier recurrence ----------------------------------
    # Hidden state and next-step gates2 travel in the loop carry (vregs), not through VMEM.
    def step(t, carry):
        hx, gates2 = carry                       # [B, H], [B, 3H] == hx @ W_hh + b_hh
        h_r = gates2[:, 0:H]
        h_z = gates2[:, H:2 * H]
        h_n = gates2[:, 2 * H:3 * H]
        r_t = jax.nn.sigmoid(i_r + h_r)
        z_t = jax.nn.sigmoid(i_z + h_z)
        n_t = jnp.tanh(i_n + r_t * h_n)
        hy = (1.0 - z_t) * n_t + z_t * hx        # [B, H]

        # One fused MXU push per step: [gates2(t+1) | q | s_pre] = hy @ [W_hh | W_q | W_sc] + b.
        fused = jnp.dot(hy, wf, preferred_element_type=jnp.float32) + bf
        q = fused[:, 3 * H:4 * H]                                   # [B, H]
        s = jnp.maximum(fused[:, 4 * H:4 * H + H2], 0.0)            # [B, H/2]  (relu; dropout = id)

        # Pointer attention logits: u[b, l] = v . tanh(q[b] + e[b, l])
        act = jnp.tanh(q[:, None, :] + e3)                          # [B, L, H]
        u = jnp.sum(v * act, axis=-1)                               # [B, L]

        # Classification head as VPU multiply + lane reduce (avoids a 1-lane MXU matmul).
        cls = jnp.concatenate(
            [jnp.sum(s * wsl_t[c:c + 1, :], axis=-1, keepdims=True) for c in range(C)],
            axis=-1) + bsl                                          # [B, C]

        logits_ref[t] = u
        cls_ref[t] = cls
        return (hy, fused[:, 0:3 * H])

    h_final, _ = lax.fori_loop(0, T, step, (h0, g2_0), unroll=True)
    hout_ref[...] = h_final


def decoder_forward(decoder_input, embedded_inputs, hidden, context, params, max_len):
    """Mirrors Decoder.forward.

    decoder_input:   [B, H]
    embedded_inputs: [L, B, H]   (unused by the forward compute path, kept for signature parity)
    hidden:          [B, H]
    context:         [L, B, H]
    Returns (pointer_probs [T,B,L], pointer_positions [T,B], cls_scores [T,B,C], hidden [B,H]).
    """
    del embedded_inputs  # never used by the torch forward path (decode_argmax result is discarded)
    B, H = hidden.shape
    L = context.shape[0]
    T = int(max_len)
    C = params["wsl"].shape[1]
    H2 = H // 2

    # Pad batch to a multiple of 8 so f32 vreg sublanes are fully used.
    B_pad = ((B + 7) // 8) * 8
    pad = B_pad - B
    x_p = jnp.pad(decoder_input, ((0, pad), (0, 0)))
    h_p = jnp.pad(hidden, ((0, pad), (0, 0)))
    ctx_blh = jnp.transpose(context, (1, 0, 2))                      # [B, L, H]
    ctx_p = jnp.pad(ctx_blh, ((0, pad), (0, 0), (0, 0)))             # [B_pad, L, H]
    ctx2d = ctx_p.reshape(B_pad * L, H)                              # keep 2-D for the MXU

    # Fuse the three hidden-state-LHS weights into one wide matmul operand.
    wf = jnp.concatenate([params["whh"], params["wq"], params["wsc"]], axis=1)   # [H, 3H+H+H2]
    bf = jnp.concatenate([params["bhh"], params["bq"], params["bsc"]], axis=1)   # [1, 3H+H+H2]
    wsl_t = jnp.transpose(params["wsl"])                                          # [C, H2]

    vmem = lambda: pl.BlockSpec(memory_space=pltpu.MemorySpace.VMEM)
    out_shape = (
        jax.ShapeDtypeStruct((T, B_pad, L), jnp.float32),
        jax.ShapeDtypeStruct((T, B_pad, C), jnp.float32),
        jax.ShapeDtypeStruct((B_pad, H), jnp.float32),
    )

    logits_p, cls_p, h_out_p = pl.pallas_call(
        _decoder_kernel,
        out_shape=out_shape,
        in_specs=[vmem() for _ in range(12)],
        out_specs=(vmem(), vmem(), vmem()),
    )(
        x_p, ctx2d, h_p,
        params["wih"], params["bih"],
        wf, bf,
        params["wref"], params["bref"], params["v"],
        wsl_t, params["bsl"],
    )

    logits = logits_p[:, :B, :]
    cls = cls_p[:, :B, :]
    h_final = h_out_p[:B, :]
    # Argmax kept out of the kernel; computed on the same logits array (first-occurrence ties).
    idxs = jnp.argmax(logits, axis=-1).astype(jnp.int32)             # [T, B]
    return logits, idxs, cls, h_final


def _reference_forward(decoder_input, hidden, context, params, max_len):
    """Pure-JAX reference of the same semantics (for validation)."""
    ctx = jnp.transpose(context, (1, 0, 2))  # [B, L, H]
    B, H = hidden.shape
    logits_all, idxs_all, cls_all = [], [], []
    h = hidden
    for _ in range(max_len):
        g1 = decoder_input @ params["wih"] + params["bih"]
        g2 = h @ params["whh"] + params["bhh"]
        i_r, i_z, i_n = g1[:, :H], g1[:, H:2 * H], g1[:, 2 * H:]
        h_r, h_z, h_n = g2[:, :H], g2[:, H:2 * H], g2[:, 2 * H:]
        r = jax.nn.sigmoid(i_r + h_r)
        z = jax.nn.sigmoid(i_z + h_z)
        n = jnp.tanh(i_n + r * h_n)
        hy = (1 - z) * n + z * h
        q = hy @ params["wq"] + params["bq"]
        e = ctx @ params["wref"] + params["bref"]
        u = jnp.sum(params["v"][0][None, None, :] * jnp.tanh(q[:, None, :] + e), axis=-1)
        idx = jnp.argmax(u, axis=1).astype(jnp.int32)
        s = jnp.maximum(hy @ params["wsc"] + params["bsc"], 0.0)
        cls = s @ params["wsl"] + params["bsl"]
        logits_all.append(u); idxs_all.append(idx); cls_all.append(cls)
        h = hy
    return jnp.stack(logits_all), jnp.stack(idxs_all), jnp.stack(cls_all), h


def _init_params(key, hidden_dim, outputclasses):
    H, C = hidden_dim, outputclasses
    ks = jax.random.split(key, 16)
    def lin(kw, kb, fan_in, fan_out):
        scale = 1.0 / jnp.sqrt(jnp.float32(fan_in))
        w = jax.random.uniform(kw, (fan_in, fan_out), jnp.float32, -scale, scale)
        b = jax.random.uniform(kb, (1, fan_out), jnp.float32, -scale, scale)
        return w, b
    p = {}
    p["wih"], p["bih"] = lin(ks[0], ks[1], H, 3 * H)
    p["whh"], p["bhh"] = lin(ks[2], ks[3], H, 3 * H)
    p["wq"], p["bq"] = lin(ks[4], ks[5], H, H)
    p["wref"], p["bref"] = lin(ks[6], ks[7], H, H)       # Conv1d(H, H, 1) == per-position linear
    scale_v = 1.0 / jnp.sqrt(jnp.float32(H))
    p["v"] = jax.random.uniform(ks[8], (1, H), jnp.float32, -scale_v, scale_v)
    p["wsc"], p["bsc"] = lin(ks[9], ks[10], H, H // 2)
    p["wsl"], p["bsl"] = lin(ks[11], ks[12], H // 2, C)
    return p


if __name__ == "__main__":
    B = 2            # batch_size
    H = 32           # hidden_dim == embedding_dim
    L = 8            # sourceL
    T = 3            # max_length (decode steps)
    C = 1            # outputclasses

    key = jax.random.PRNGKey(0)
    k_in, k_emb, k_hid, k_ctx, k_par = jax.random.split(key, 5)

    decoder_input = jax.random.normal(k_in, (B, H), jnp.float32)
    embedded_inputs = jax.random.normal(k_emb, (L, B, H), jnp.float32)
    hidden = jax.random.normal(k_hid, (B, H), jnp.float32)
    context = jax.random.normal(k_ctx, (L, B, H), jnp.float32)
    params = _init_params(k_par, H, C)

    fwd = jax.jit(functools.partial(decoder_forward, max_len=T))
    logits, idxs, cls_scores, h_final = fwd(decoder_input, embedded_inputs, hidden, context, params)
    jax.block_until_ready((logits, idxs, cls_scores, h_final))

    # Validation against a pure-JAX reference.
    r_logits, r_idxs, r_cls, r_h = _reference_forward(decoder_input, hidden, context, params, T)
    assert jnp.allclose(logits, r_logits, atol=1e-3, rtol=1e-3)
    assert jnp.array_equal(idxs, r_idxs)
    assert jnp.allclose(cls_scores, r_cls, atol=1e-3, rtol=1e-3)
    assert jnp.allclose(h_final, r_h, atol=1e-3, rtol=1e-3)

    print("KERNEL_OK")
</pallas_src>

<mosaic_0001>
module attributes {stable_mosaic.version = 11 : i64} {
  func.func @_decoder_kernel(%arg0: memref<8x32xf32, #tpu.memory_space<vmem>>, %arg1: memref<64x32xf32, #tpu.memory_space<vmem>>, %arg2: memref<8x32xf32, #tpu.memory_space<vmem>>, %arg3: memref<32x96xf32, #tpu.memory_space<vmem>>, %arg4: memref<1x96xf32, #tpu.memory_space<vmem>>, %arg5: memref<32x144xf32, #tpu.memory_space<vmem>>, %arg6: memref<1x144xf32, #tpu.memory_space<vmem>>, %arg7: memref<32x32xf32, #tpu.memory_space<vmem>>, %arg8: memref<1x32xf32, #tpu.memory_space<vmem>>, %arg9: memref<1x32xf32, #tpu.memory_space<vmem>>, %arg10: memref<1x16xf32, #tpu.memory_space<vmem>>, %arg11: memref<1x1xf32, #tpu.memory_space<vmem>>, %arg12: memref<3x8x8xf32, #tpu.memory_space<vmem>>, %arg13: memref<3x8x1xf32, #tpu.memory_space<vmem>>, %arg14: memref<8x32xf32, #tpu.memory_space<vmem>>) attributes {dimension_semantics = [], scalar_prefetch = 0 : i64, scratch_operands = 0 : i64, tpu.core_type = #tpu.core_type<tc>} {
    %c0 = arith.constant 0 : index
    %c0_0 = arith.constant 0 : index
    %0 = vector.load %arg2[%c0, %c0_0] : memref<8x32xf32, #tpu.memory_space<vmem>>, vector<8x32xf32>
    %c0_1 = arith.constant 0 : index
    %c0_2 = arith.constant 0 : index
    %1 = vector.load %arg5[%c0_1, %c0_2] : memref<32x144xf32, #tpu.memory_space<vmem>>, vector<32x144xf32>
    %c0_3 = arith.constant 0 : index
    %c0_4 = arith.constant 0 : index
    %2 = vector.load %arg6[%c0_3, %c0_4] : memref<1x144xf32, #tpu.memory_space<vmem>>, vector<1x144xf32>
    %c0_5 = arith.constant 0 : index
    %c0_6 = arith.constant 0 : index
    %3 = vector.load %arg9[%c0_5, %c0_6] : memref<1x32xf32, #tpu.memory_space<vmem>>, vector<1x32xf32>
    %c0_7 = arith.constant 0 : index
    %c0_8 = arith.constant 0 : index
    %4 = vector.load %arg10[%c0_7, %c0_8] : memref<1x16xf32, #tpu.memory_space<vmem>>, vector<1x16xf32>
    %c0_9 = arith.constant 0 : index
    %c0_10 = arith.constant 0 : index
    %5 = vector.load %arg11[%c0_9, %c0_10] : memref<1x1xf32, #tpu.memory_space<vmem>>, vector<1x1xf32>
    %c0_11 = arith.constant 0 : index
    %c0_12 = arith.constant 0 : index
    %6 = vector.load %arg0[%c0_11, %c0_12] : memref<8x32xf32, #tpu.memory_space<vmem>>, vector<8x32xf32>
    %c0_13 = arith.constant 0 : index
    %c0_14 = arith.constant 0 : index
    %7 = vector.load %arg3[%c0_13, %c0_14] : memref<32x96xf32, #tpu.memory_space<vmem>>, vector<32x96xf32>
    %cst = arith.constant dense<0.000000e+00> : vector<8x96xf32>
    %8 = tpu.matmul %6, %7, %cst {dimension_numbers = #tpu.dot_dimension_numbers<[1], [0], [0], [1], [0, 0, 1, 1], [], []>} : vector<8x32xf32>, vector<32x96xf32>, vector<8x96xf32> -> vector<8x96xf32>
    %c0_15 = arith.constant 0 : index
    %c0_16 = arith.constant 0 : index
    %9 = vector.load %arg4[%c0_15, %c0_16] : memref<1x96xf32, #tpu.memory_space<vmem>>, vector<1x96xf32>
    %10 = vector.broadcast %9 : vector<1x96xf32> to vector<8x96xf32>
    %11 = arith.addf %8, %10 : vector<8x96xf32>
    %12 = vector.extract_strided_slice %11 {offsets = [0, 0], sizes = [8, 32], strides = [1, 1]} : vector<8x96xf32> to vector<8x32xf32>
    %13 = vector.extract_strided_slice %11 {offsets = [0, 32], sizes = [8, 32], strides = [1, 1]} : vector<8x96xf32> to vector<8x32xf32>
    %14 = vector.extract_strided_slice %11 {offsets = [0, 64], sizes = [8, 32], strides = [1, 1]} : vector<8x96xf32> to vector<8x32xf32>
    %c0_17 = arith.constant 0 : index
    %c0_18 = arith.constant 0 : index
    %15 = vector.load %arg1[%c0_17, %c0_18] : memref<64x32xf32, #tpu.memory_space<vmem>>, vector<64x32xf32>
    %c0_19 = arith.constant 0 : index
    %c0_20 = arith.constant 0 : index
    %16 = vector.load %arg7[%c0_19, %c0_20] : memref<32x32xf32, #tpu.memory_space<vmem>>, vector<32x32xf32>
    %cst_21 = arith.constant dense<0.000000e+00> : vector<64x32xf32>
    %17 = tpu.matmul %15, %16, %cst_21 {dimension_numbers = #tpu.dot_dimension_numbers<[1], [0], [0], [1], [0, 0, 1, 1], [], []>} : vector<64x32xf32>, vector<32x32xf32>, vector<64x32xf32> -> vector<64x32xf32>
    %c0_22 = arith.constant 0 : index
    %c0_23 = arith.constant 0 : index
    %18 = vector.load %arg8[%c0_22, %c0_23] : memref<1x32xf32, #tpu.memory_space<vmem>>, vector<1x32xf32>
    %19 = vector.broadcast %18 : vector<1x32xf32> to vector<64x32xf32>
    %20 = arith.addf %17, %19 : vector<64x32xf32>
    %21 = vector.shape_cast %20 : vector<64x32xf32> to vector<8x8x32xf32>
    %cst_24 = arith.constant dense<0.000000e+00> : vector<8x144xf32>
    %22 = tpu.matmul %0, %1, %cst_24 {dimension_numbers = #tpu.dot_dimension_numbers<[1], [0], [0], [1], [0, 0, 1, 1], [], []>} : vector<8x32xf32>, vector<32x144xf32>, vector<8x144xf32> -> vector<8x144xf32>
    %23 = vector.broadcast %2 : vector<1x144xf32> to vector<8x144xf32>
    %24 = arith.addf %22, %23 : vector<8x144xf32>
    %25 = vector.extract_strided_slice %24 {offsets = [0, 0], sizes = [8, 96], strides = [1, 1]} : vector<8x144xf32> to vector<8x96xf32>
    %c0_i32 = arith.constant 0 : i32
    %26 = vector.extract_strided_slice %25 {offsets = [0, 0], sizes = [8, 32], strides = [1, 1]} : vector<8x96xf32> to vector<8x32xf32>
    %27 = vector.extract_strided_slice %25 {offsets = [0, 32], sizes = [8, 32], strides = [1, 1]} : vector<8x96xf32> to vector<8x32xf32>
    %28 = vector.extract_strided_slice %25 {offsets = [0, 64], sizes = [8, 32], strides = [1, 1]} : vector<8x96xf32> to vector<8x32xf32>
    %29 = arith.addf %12, %26 : vector<8x32xf32>
    %30 = arith.negf %29 : vector<8x32xf32>
    %31 = math.exp %30 : vector<8x32xf32>
    %cst_25 = arith.constant 1.000000e+00 : f32
    %32 = vector.broadcast %cst_25 : f32 to vector<8x32xf32>
    %33 = arith.addf %32, %31 : vector<8x32xf32>
    %34 = arith.divf %32, %33 : vector<8x32xf32>
    %35 = arith.addf %13, %27 : vector<8x32xf32>
    %36 = arith.negf %35 : vector<8x32xf32>
    %37 = math.exp %36 : vector<8x32xf32>
    %cst_26 = arith.constant 1.000000e+00 : f32
    %38 = vector.broadcast %cst_26 : f32 to vector<8x32xf32>
    %39 = arith.addf %38, %37 : vector<8x32xf32>
    %40 = arith.divf %38, %39 : vector<8x32xf32>
    %41 = arith.mulf %34, %28 : vector<8x32xf32>
    %42 = arith.addf %14, %41 : vector<8x32xf32>
    %43 = math.tanh %42 : vector<8x32xf32>
    %cst_27 = arith.constant 1.000000e+00 : f32
    %44 = vector.broadcast %cst_27 : f32 to vector<8x32xf32>
    %45 = arith.subf %44, %40 : vector<8x32xf32>
    %46 = arith.mulf %45, %43 : vector<8x32xf32>
    %47 = arith.mulf %40, %0 : vector<8x32xf32>
    %48 = arith.addf %46, %47 : vector<8x32xf32>
    %cst_28 = arith.constant dense<0.000000e+00> : vector<8x144xf32>
    %49 = tpu.matmul %48, %1, %cst_28 {dimension_numbers = #tpu.dot_dimension_numbers<[1], [0], [0], [1], [0, 0, 1, 1], [], []>} : vector<8x32xf32>, vector<32x144xf32>, vector<8x144xf32> -> vector<8x144xf32>
    %50 = vector.broadcast %2 : vector<1x144xf32> to vector<8x144xf32>
    %51 = arith.addf %49, %50 : vector<8x144xf32>
    %52 = vector.extract_strided_slice %51 {offsets = [0, 96], sizes = [8, 32], strides = [1, 1]} : vector<8x144xf32> to vector<8x32xf32>
    %53 = vector.extract_strided_slice %51 {offsets = [0, 128], sizes = [8, 16], strides = [1, 1]} : vector<8x144xf32> to vector<8x16xf32>
    %cst_29 = arith.constant 0.000000e+00 : f32
    %54 = vector.broadcast %cst_29 : f32 to vector<8x16xf32>
    %55 = arith.maximumf %53, %54 : vector<8x16xf32>
    %56 = vector.shape_cast %52 : vector<8x32xf32> to vector<8x1x32xf32>
    %57 = vector.broadcast %56 : vector<8x1x32xf32> to vector<8x8x32xf32>
    %58 = arith.addf %57, %21 : vector<8x8x32xf32>
    %59 = math.tanh %58 : vector<8x8x32xf32>
    %60 = vector.shape_cast %3 : vector<1x32xf32> to vector<1x1x32xf32>
    %61 = vector.broadcast %60 : vector<1x1x32xf32> to vector<8x8x32xf32>
    %62 = arith.mulf %61, %59 : vector<8x8x32xf32>
    %cst_30 = arith.constant dense<0.000000e+00> : vector<8x8xf32>
    %63 = vector.multi_reduction <add>, %62, %cst_30 [2] : vector<8x8x32xf32> to vector<8x8xf32>
    %64 = vector.broadcast %4 : vector<1x16xf32> to vector<8x16xf32>
    %65 = arith.mulf %55, %64 : vector<8x16xf32>
    %cst_31 = arith.constant dense<0.000000e+00> : vector<8xf32>
    %66 = vector.multi_reduction <add>, %65, %cst_31 [1] : vector<8x16xf32> to vector<8xf32>
    %67 = vector.shape_cast %66 : vector<8xf32> to vector<8x1xf32>
    %68 = vector.broadcast %5 : vector<1x1xf32> to vector<8x1xf32>
    %69 = arith.addf %67, %68 : vector<8x1xf32>
    %70 = arith.index_cast %c0_i32 : i32 to index
    %c0_32 = arith.constant 0 : index
    %c0_33 = arith.constant 0 : index
    %71 = vector.load %arg12[%70, %c0_32, %c0_33] : memref<3x8x8xf32, #tpu.memory_space<vmem>>, vector<1x8x8xf32>
    %72 = vector.shape_cast %71 : vector<1x8x8xf32> to vector<8x8xf32>
    %73 = vector.shape_cast %63 : vector<8x8xf32> to vector<1x8x8xf32>
    tpu.vector_store %arg12[%70, %c0_32, %c0_33], %73 {strides = array<i32>} : memref<3x8x8xf32, #tpu.memory_space<vmem>>, vector<1x8x8xf32>,
    %74 = arith.index_cast %c0_i32 : i32 to index
    %c0_34 = arith.constant 0 : index
    %c0_35 = arith.constant 0 : index
    %75 = vector.load %arg13[%74, %c0_34, %c0_35] : memref<3x8x1xf32, #tpu.memory_space<vmem>>, vector<1x8x1xf32>
    %76 = vector.shape_cast %75 : vector<1x8x1xf32> to vector<8x1xf32>
    %77 = vector.shape_cast %69 : vector<8x1xf32> to vector<1x8x1xf32>
    tpu.vector_store %arg13[%74, %c0_34, %c0_35], %77 {strides = array<i32>} : memref<3x8x1xf32, #tpu.memory_space<vmem>>, vector<1x8x1xf32>,
    %78 = vector.extract_strided_slice %51 {offsets = [0, 0], sizes = [8, 96], strides = [1, 1]} : vector<8x144xf32> to vector<8x96xf32>
    %c1_i32 = arith.constant 1 : i32
    %79 = vector.extract_strided_slice %78 {offsets = [0, 0], sizes = [8, 32], strides = [1, 1]} : vector<8x96xf32> to vector<8x32xf32>
    %80 = vector.extract_strided_slice %78 {offsets = [0, 32], sizes = [8, 32], strides = [1, 1]} : vector<8x96xf32> to vector<8x32xf32>
    %81 = vector.extract_strided_slice %78 {offsets = [0, 64], sizes = [8, 32], strides = [1, 1]} : vector<8x96xf32> to vector<8x32xf32>
    %82 = arith.addf %12, %79 : vector<8x32xf32>
    %83 = arith.negf %82 : vector<8x32xf32>
    %84 = math.exp %83 : vector<8x32xf32>
    %cst_36 = arith.constant 1.000000e+00 : f32
    %85 = vector.broadcast %cst_36 : f32 to vector<8x32xf32>
    %86 = arith.addf %85, %84 : vector<8x32xf32>
    %87 = arith.divf %85, %86 : vector<8x32xf32>
    %88 = arith.addf %13, %80 : vector<8x32xf32>
    %89 = arith.negf %88 : vector<8x32xf32>
    %90 = math.exp %89 : vector<8x32xf32>
    %cst_37 = arith.constant 1.000000e+00 : f32
    %91 = vector.broadcast %cst_37 : f32 to vector<8x32xf32>
    %92 = arith.addf %91, %90 : vector<8x32xf32>
    %93 = arith.divf %91, %92 : vector<8x32xf32>
    %94 = arith.mulf %87, %81 : vector<8x32xf32>
    %95 = arith.addf %14, %94 : vector<8x32xf32>
    %96 = math.tanh %95 : vector<8x32xf32>
    %cst_38 = arith.constant 1.000000e+00 : f32
    %97 = vector.broadcast %cst_38 : f32 to vector<8x32xf32>
    %98 = arith.subf %97, %93 : vector<8x32xf32>
    %99 = arith.mulf %98, %96 : vector<8x32xf32>
    %100 = arith.mulf %93, %48 : vector<8x32xf32>
    %101 = arith.addf %99, %100 : vector<8x32xf32>
    %cst_39 = arith.constant dense<0.000000e+00> : vector<8x144xf32>
    %102 = tpu.matmul %101, %1, %cst_39 {dimension_numbers = #tpu.dot_dimension_numbers<[1], [0], [0], [1], [0, 0, 1, 1], [], []>} : vector<8x32xf32>, vector<32x144xf32>, vector<8x144xf32> -> vector<8x144xf32>
    %103 = vector.broadcast %2 : vector<1x144xf32> to vector<8x144xf32>
    %104 = arith.addf %102, %103 : vector<8x144xf32>
    %105 = vector.extract_strided_slice %104 {offsets = [0, 96], sizes = [8, 32], strides = [1, 1]} : vector<8x144xf32> to vector<8x32xf32>
    %106 = vector.extract_strided_slice %104 {offsets = [0, 128], sizes = [8, 16], strides = [1, 1]} : vector<8x144xf32> to vector<8x16xf32>
    %cst_40 = arith.constant 0.000000e+00 : f32
    %107 = vector.broadcast %cst_40 : f32 to vector<8x16xf32>
    %108 = arith.maximumf %106, %107 : vector<8x16xf32>
    %109 = vector.shape_cast %105 : vector<8x32xf32> to vector<8x1x32xf32>
    %110 = vector.broadcast %109 : vector<8x1x32xf32> to vector<8x8x32xf32>
    %111 = arith.addf %110, %21 : vector<8x8x32xf32>
    %112 = math.tanh %111 : vector<8x8x32xf32>
    %113 = vector.shape_cast %3 : vector<1x32xf32> to vector<1x1x32xf32>
    %114 = vector.broadcast %113 : vector<1x1x32xf32> to vector<8x8x32xf32>
    %115 = arith.mulf %114, %112 : vector<8x8x32xf32>
    %cst_41 = arith.constant dense<0.000000e+00> : vector<8x8xf32>
    %116 = vector.multi_reduction <add>, %115, %cst_41 [2] : vector<8x8x32xf32> to vector<8x8xf32>
    %117 = vector.broadcast %4 : vector<1x16xf32> to vector<8x16xf32>
    %118 = arith.mulf %108, %117 : vector<8x16xf32>
    %cst_42 = arith.constant dense<0.000000e+00> : vector<8xf32>
    %119 = vector.multi_reduction <add>, %118, %cst_42 [1] : vector<8x16xf32> to vector<8xf32>
    %120 = vector.shape_cast %119 : vector<8xf32> to vector<8x1xf32>
    %121 = vector.broadcast %5 : vector<1x1xf32> to vector<8x1xf32>
    %122 = arith.addf %120, %121 : vector<8x1xf32>
    %123 = arith.index_cast %c1_i32 : i32 to index
    %c0_43 = arith.constant 0 : index
    %c0_44 = arith.constant 0 : index
    %124 = vector.load %arg12[%123, %c0_43, %c0_44] : memref<3x8x8xf32, #tpu.memory_space<vmem>>, vector<1x8x8xf32>
    %125 = vector.shape_cast %124 : vector<1x8x8xf32> to vector<8x8xf32>
    %126 = vector.shape_cast %116 : vector<8x8xf32> to vector<1x8x8xf32>
    tpu.vector_store %arg12[%123, %c0_43, %c0_44], %126 {strides = array<i32>} : memref<3x8x8xf32, #tpu.memory_space<vmem>>, vector<1x8x8xf32>,
    %127 = arith.index_cast %c1_i32 : i32 to index
    %c0_45 = arith.constant 0 : index
    %c0_46 = arith.constant 0 : index
    %128 = vector.load %arg13[%127, %c0_45, %c0_46] : memref<3x8x1xf32, #tpu.memory_space<vmem>>, vector<1x8x1xf32>
    %129 = vector.shape_cast %128 : vector<1x8x1xf32> to vector<8x1xf32>
    %130 = vector.shape_cast %122 : vector<8x1xf32> to vector<1x8x1xf32>
    tpu.vector_store %arg13[%127, %c0_45, %c0_46], %130 {strides = array<i32>} : memref<3x8x1xf32, #tpu.memory_space<vmem>>, vector<1x8x1xf32>,
    %131 = vector.extract_strided_slice %104 {offsets = [0, 0], sizes = [8, 96], strides = [1, 1]} : vector<8x144xf32> to vector<8x96xf32>
    %c2_i32 = arith.constant 2 : i32
    %132 = vector.extract_strided_slice %131 {offsets = [0, 0], sizes = [8, 32], strides = [1, 1]} : vector<8x96xf32> to vector<8x32xf32>
    %133 = vector.extract_strided_slice %131 {offsets = [0, 32], sizes = [8, 32], strides = [1, 1]} : vector<8x96xf32> to vector<8x32xf32>
    %134 = vector.extract_strided_slice %131 {offsets = [0, 64], sizes = [8, 32], strides = [1, 1]} : vector<8x96xf32> to vector<8x32xf32>
    %135 = arith.addf %12, %132 : vector<8x32xf32>
    %136 = arith.negf %135 : vector<8x32xf32>
    %137 = math.exp %136 : vector<8x32xf32>
    %cst_47 = arith.constant 1.000000e+00 : f32
    %138 = vector.broadcast %cst_47 : f32 to vector<8x32xf32>
    %139 = arith.addf %138, %137 : vector<8x32xf32>
    %140 = arith.divf %138, %139 : vector<8x32xf32>
    %141 = arith.addf %13, %133 : vector<8x32xf32>
    %142 = arith.negf %141 : vector<8x32xf32>
    %143 = math.exp %142 : vector<8x32xf32>
    %cst_48 = arith.constant 1.000000e+00 : f32
    %144 = vector.broadcast %cst_48 : f32 to vector<8x32xf32>
    %145 = arith.addf %144, %143 : vector<8x32xf32>
    %146 = arith.divf %144, %145 : vector<8x32xf32>
    %147 = arith.mulf %140, %134 : vector<8x32xf32>
    %148 = arith.addf %14, %147 : vector<8x32xf32>
    %149 = math.tanh %148 : vector<8x32xf32>
    %cst_49 = arith.constant 1.000000e+00 : f32
    %150 = vector.broadcast %cst_49 : f32 to vector<8x32xf32>
    %151 = arith.subf %150, %146 : vector<8x32xf32>
    %152 = arith.mulf %151, %149 : vector<8x32xf32>
    %153 = arith.mulf %146, %101 : vector<8x32xf32>
    %154 = arith.addf %152, %153 : vector<8x32xf32>
    %cst_50 = arith.constant dense<0.000000e+00> : vector<8x144xf32>
    %155 = tpu.matmul %154, %1, %cst_50 {dimension_numbers = #tpu.dot_dimension_numbers<[1], [0], [0], [1], [0, 0, 1, 1], [], []>} : vector<8x32xf32>, vector<32x144xf32>, vector<8x144xf32> -> vector<8x144xf32>
    %156 = vector.broadcast %2 : vector<1x144xf32> to vector<8x144xf32>
    %157 = arith.addf %155, %156 : vector<8x144xf32>
    %158 = vector.extract_strided_slice %157 {offsets = [0, 96], sizes = [8, 32], strides = [1, 1]} : vector<8x144xf32> to vector<8x32xf32>
    %159 = vector.extract_strided_slice %157 {offsets = [0, 128], sizes = [8, 16], strides = [1, 1]} : vector<8x144xf32> to vector<8x16xf32>
    %cst_51 = arith.constant 0.000000e+00 : f32
    %160 = vector.broadcast %cst_51 : f32 to vector<8x16xf32>
    %161 = arith.maximumf %159, %160 : vector<8x16xf32>
    %162 = vector.shape_cast %158 : vector<8x32xf32> to vector<8x1x32xf32>
    %163 = vector.broadcast %162 : vector<8x1x32xf32> to vector<8x8x32xf32>
    %164 = arith.addf %163, %21 : vector<8x8x32xf32>
    %165 = math.tanh %164 : vector<8x8x32xf32>
    %166 = vector.shape_cast %3 : vector<1x32xf32> to vector<1x1x32xf32>
    %167 = vector.broadcast %166 : vector<1x1x32xf32> to vector<8x8x32xf32>
    %168 = arith.mulf %167, %165 : vector<8x8x32xf32>
    %cst_52 = arith.constant dense<0.000000e+00> : vector<8x8xf32>
    %169 = vector.multi_reduction <add>, %168, %cst_52 [2] : vector<8x8x32xf32> to vector<8x8xf32>
    %170 = vector.broadcast %4 : vector<1x16xf32> to vector<8x16xf32>
    %171 = arith.mulf %161, %170 : vector<8x16xf32>
    %cst_53 = arith.constant dense<0.000000e+00> : vector<8xf32>
    %172 = vector.multi_reduction <add>, %171, %cst_53 [1] : vector<8x16xf32> to vector<8xf32>
    %173 = vector.shape_cast %172 : vector<8xf32> to vector<8x1xf32>
    %174 = vector.broadcast %5 : vector<1x1xf32> to vector<8x1xf32>
    %175 = arith.addf %173, %174 : vector<8x1xf32>
    %176 = arith.index_cast %c2_i32 : i32 to index
    %c0_54 = arith.constant 0 : index
    %c0_55 = arith.constant 0 : index
    %177 = vector.load %arg12[%176, %c0_54, %c0_55] : memref<3x8x8xf32, #tpu.memory_space<vmem>>, vector<1x8x8xf32>
    %178 = vector.shape_cast %177 : vector<1x8x8xf32> to vector<8x8xf32>
    %179 = vector.shape_cast %169 : vector<8x8xf32> to vector<1x8x8xf32>
    tpu.vector_store %arg12[%176, %c0_54, %c0_55], %179 {strides = array<i32>} : memref<3x8x8xf32, #tpu.memory_space<vmem>>, vector<1x8x8xf32>,
    %180 = arith.index_cast %c2_i32 : i32 to index
    %c0_56 = arith.constant 0 : index
    %c0_57 = arith.constant 0 : index
    %181 = vector.load %arg13[%180, %c0_56, %c0_57] : memref<3x8x1xf32, #tpu.memory_space<vmem>>, vector<1x8x1xf32>
    %182 = vector.shape_cast %181 : vector<1x8x1xf32> to vector<8x1xf32>
    %183 = vector.shape_cast %175 : vector<8x1xf32> to vector<1x8x1xf32>
    tpu.vector_store %arg13[%180, %c0_56, %c0_57], %183 {strides = array<i32>} : memref<3x8x1xf32, #tpu.memory_space<vmem>>, vector<1x8x1xf32>,
    %184 = vector.extract_strided_slice %157 {offsets = [0, 0], sizes = [8, 96], strides = [1, 1]} : vector<8x144xf32> to vector<8x96xf32>
    %c3_i32 = arith.constant 3 : i32
    %c0_58 = arith.constant 0 : index
    %c0_59 = arith.constant 0 : index
    %185 = vector.load %arg14[%c0_58, %c0_59] : memref<8x32xf32, #tpu.memory_space<vmem>>, vector<8x32xf32>
    tpu.vector_store %arg14[%c0_58, %c0_59], %154 {strides = array<i32>} : memref<8x32xf32, #tpu.memory_space<vmem>>, vector<8x32xf32>,
    return
  }
}

</mosaic_0001>

<llo_original>
// kernel: decoder_forward.1
$region0: #{decoder_forward.1}
  #allocation0 [shape = 'u32[]', space=smem, size = 0x4, offset = 0x4, fixed_abs, tag = 'smem constant byte address 0x4 - core index']
  #allocation1 [shape = 'u32[72,128]{1,0:T(1,128)}', space=vmem, size = 0x9000, scoped, tag = 'internal scratch']
  #allocation2 [shape = 'f32[1,1]{1,0:T(1,128)S(1)}', space=vmem, size = 0x200, scoped, tag = 'scoped memory for decoder_forward.1']
  %s0 = inlined_call_operand.vmem [shape: f32[8,32], index: 0, kind: input, shape index: {}]
  %s1 = inlined_call_operand.vmem [shape: f32[64,32], index: 1, kind: input, shape index: {}]
  %s2 = inlined_call_operand.vmem [shape: f32[8,32], index: 2, kind: input, shape index: {}]
  %s3 = inlined_call_operand.vmem [shape: f32[32,96], index: 3, kind: input, shape index: {}]
  %s4 = inlined_call_operand.vmem [shape: f32[1,96], index: 4, kind: input, shape index: {}]
  %s5 = inlined_call_operand.vmem [shape: f32[32,144], index: 5, kind: input, shape index: {}]
  %s6 = inlined_call_operand.vmem [shape: f32[1,144], index: 6, kind: input, shape index: {}]
  %s7 = inlined_call_operand.vmem [shape: f32[32,32], index: 7, kind: input, shape index: {}]
  %s8 = inlined_call_operand.vmem [shape: f32[1,32], index: 8, kind: input, shape index: {}]
  %s9 = inlined_call_operand.vmem [shape: f32[1,32], index: 9, kind: input, shape index: {}]
  %s10 = inlined_call_operand.vmem [shape: f32[1,16], index: 10, kind: input, shape index: {}]
  %s11 = inlined_call_operand.<no memory space> [shape: f32[1,1], index: 11, kind: input, shape index: {}]
  %s12 = inlined_call_operand.vmem [shape: f32[3,8,8], index: 12, kind: output, shape index: {0}]
  %s13 = inlined_call_operand.vmem [shape: f32[3,8,1], index: 13, kind: output, shape index: {1}]
  %s14 = inlined_call_operand.vmem [shape: f32[8,32], index: 14, kind: output, shape index: {2}]
  %15 = xla_tuple %s12, %s13, %s14
  %s16 = sld [smem:[#allocation0]]
  $region74: #{decoder_forward.1} parent=0
    _
  %s18 = ssub.s32 1, %s16
  %s19 = scalar_select 0, %s18, %s16
  %v20 = vstv %s11
  %21 = vst [vmem:[#allocation2] sm:$0x1] %v20
  // Predicated region
  $region2: #{decoder_forward.1} parent=0 // pred_check
    _
  $region3: #{decoder_forward.1} parent=0 // pred_check_branch
    %23 = sbr.rel (0) target = $region5
  $region4: #{decoder_forward.1} parent=0 // pred_region
    _
  $region5: #{decoder_forward.1} parent=0 // pred_fallthru
    _
  // Predicated region
  $region6: #{decoder_forward.1} parent=0 // pred_check
    _
  $region7: #{decoder_forward.1} parent=0 // pred_check_branch
    %25 = sbr.rel (0) target = $region9
  $region8: #{decoder_forward.1} parent=0 // pred_region
    _
  $region9: #{decoder_forward.1} parent=0 // pred_fallthru
    _
  // Predicated region
  $region10: #{decoder_forward.1} parent=0 // pred_check
    _
  $region11: #{decoder_forward.1} parent=0 // pred_check_branch
    %27 = sbr.rel (0) target = $region13
  $region12: #{decoder_forward.1} parent=0 // pred_region
    _
  $region13: #{decoder_forward.1} parent=0 // pred_fallthru
    _
  // Predicated region
  $region14: #{decoder_forward.1} parent=0 // pred_check
    _
  $region15: #{decoder_forward.1} parent=0 // pred_check_branch
    %29 = sbr.rel (0) target = $region17
  $region16: #{decoder_forward.1} parent=0 // pred_region
    _
  $region17: #{decoder_forward.1} parent=0 // pred_fallthru
    _
  // Predicated region
  $region18: #{decoder_forward.1} parent=0 // pred_check
    _
  $region19: #{decoder_forward.1} parent=0 // pred_check_branch
    %31 = sbr.rel (0) target = $region21
  $region20: #{decoder_forward.1} parent=0 // pred_region
    _
  $region21: #{decoder_forward.1} parent=0 // pred_fallthru
    _
  // Predicated region
  $region22: #{decoder_forward.1} parent=0 // pred_check
    _
  $region23: #{decoder_forward.1} parent=0 // pred_check_branch
    %33 = sbr.rel (0) target = $region25
  $region24: #{decoder_forward.1} parent=0 // pred_region
    _
  $region25: #{decoder_forward.1} parent=0 // pred_fallthru
    _
  // Predicated region
  $region26: #{decoder_forward.1} parent=0 // pred_check
    _
  $region27: #{decoder_forward.1} parent=0 // pred_check_branch
    %35 = sbr.rel (0) target = $region29
  $region28: #{decoder_forward.1} parent=0 // pred_region
    _
  $region29: #{decoder_forward.1} parent=0 // pred_fallthru
    _
  // Predicated region
  $region30: #{decoder_forward.1} parent=0 // pred_check
    _
  $region31: #{decoder_forward.1} parent=0 // pred_check_branch
    %37 = sbr.rel (0) target = $region33
  $region32: #{decoder_forward.1} parent=0 // pred_region
    _
  $region33: #{decoder_forward.1} parent=0 // pred_fallthru
    _
  // Predicated region
  $region34: #{decoder_forward.1} parent=0 // pred_check
    _
  $region35: #{decoder_forward.1} parent=0 // pred_check_branch
    %39 = sbr.rel (0) target = $region37
  $region36: #{decoder_forward.1} parent=0 // pred_region
    _
  $region37: #{decoder_forward.1} parent=0 // pred_fallthru
    _
  // Predicated region
  $region38: #{decoder_forward.1} parent=0 // pred_check
    _
  $region39: #{decoder_forward.1} parent=0 // pred_check_branch
    %41 = sbr.rel (0) target = $region41
  $region40: #{decoder_forward.1} parent=0 // pred_region
    _
  $region41: #{decoder_forward.1} parent=0 // pred_fallthru
    _
  // Predicated region
  $region42: #{decoder_forward.1} parent=0 // pred_check
    _
  $region43: #{decoder_forward.1} parent=0 // pred_check_branch
    %43 = sbr.rel (0) target = $region45
  $region44: #{decoder_forward.1} parent=0 // pred_region
    _
  $region45: #{decoder_forward.1} parent=0 // pred_fallthru
    _
  // Predicated region
  $region46: #{decoder_forward.1} parent=0 // pred_check
    _
  $region47: #{decoder_forward.1} parent=0 // pred_check_branch
    %45 = sbr.rel (0) target = $region49
  $region48: #{decoder_forward.1} parent=0 // pred_region
    _
  $region49: #{decoder_forward.1} parent=0 // pred_fallthru
    _
  %v46 = vld [vmem:[%s2] sm:$0xff]
  %v47 = vld [vmem:[%s5] sm:$0xff]
  %v48 = vld [vmem:[%s5 + $0x8] sm:$0xff]
  %v49 = vld [vmem:[%s5 + $0x10] sm:$0xff]
  %v50 = vld [vmem:[%s5 + $0x18] sm:$0xff]
  %v51 = vld [vmem:[%s5 + $0x20] sm:$0xff]
  %v52 = vld [vmem:[%s5 + $0x28] sm:$0xff]
  %v53 = vld [vmem:[%s5 + $0x30] sm:$0xff]
  %v54 = vld [vmem:[%s5 + $0x38] sm:$0xff]
  %v55 = vld [vmem:[%s6] sm:$0x3]
  %v56 = vld [vmem:[%s9] sm:$0x1]
  %v57 = vld [vmem:[%s10] sm:$0x1]
  %v58 = vld [vmem:[#allocation2] sm:$0x1]
  %v59 = vld [vmem:[%s0] sm:$0xff]
  %v60 = vld [vmem:[%s3] sm:$0xff]
  %v61 = vld [vmem:[%s3 + $0x8] sm:$0xff]
  %v62 = vld [vmem:[%s3 + $0x10] sm:$0xff]
  %v63 = vld [vmem:[%s3 + $0x18] sm:$0xff]
  %v64 = vld [vmem:[%s4] sm:$0x1]
  %v66 = vperm.slane %v64, 0
  %vm68 = vcmask 261120
  %v70 = vsel %vm68, %v59, 0
  %72 = vmatpush.msra.mxu0 0.0
  %73 = vmatpush.msra.mxu0 0.0
  %74 = vmatpush.msra.mxu0 0.0
  %75 = vmatpush.msra.mxu0 0.0
  %76 = vmatpush.msra.mxu0 0.0
  %77 = vmatpush.msra.mxu0 0.0
  %78 = vmatpush.msra.mxu0 0.0
  %79 = vmatpush.msra.mxu0 0.0
  %80 = vmatpush.msra.mxu0 0.0
  %81 = vmatpush.msra.mxu0 0.0
  %82 = vmatpush.msra.mxu0 0.0
  %83 = vmatpush.msra.mxu0 0.0
  %84 = vmatpush.msra.mxu0 %v63
  %85 = vmatpush.msra.mxu0 %v62
  %86 = vmatpush.msra.mxu0 %v61
  %87 = vmatpush.msra.mxu0 %v60
  %88 = vmatmul.f32.gmra.mxu0 %v70
  %v89 = vpop.f32.mrf.mxu0
  %v90 = vadd.f32 %v66, %v89
  %91 = vdwg.mxu0
  %v92 = vld [vmem:[%s1] sm:$0xff]
  %v93 = vld [vmem:[%s1 + $0x8] sm:$0xff]
  %v94 = vld [vmem:[%s1 + $0x10] sm:$0xff]
  %v95 = vld [vmem:[%s1 + $0x18] sm:$0xff]
  %v96 = vld [vmem:[%s1 + $0x20] sm:$0xff]
  %v97 = vld [vmem:[%s1 + $0x28] sm:$0xff]
  %v98 = vld [vmem:[%s1 + $0x30] sm:$0xff]
  %v99 = vld [vmem:[%s1 + $0x38] sm:$0xff]
  %v100 = vld [vmem:[%s7] sm:$0xff]
  %v101 = vld [vmem:[%s7 + $0x8] sm:$0xff]
  %v102 = vld [vmem:[%s7 + $0x10] sm:$0xff]
  %v103 = vld [vmem:[%s7 + $0x18] sm:$0xff]
  %v104 = vld [vmem:[%s8] sm:$0x1]
  %v106 = vperm.slane %v104, 0
  %v109 = vsel %vm68, %v92, 0
  %v112 = vsel %vm68, %v93, 0
  %v115 = vsel %vm68, %v94, 0
  %v118 = vsel %vm68, %v95, 0
  %v121 = vsel %vm68, %v96, 0
  %v124 = vsel %vm68, %v97, 0
  %v127 = vsel %vm68, %v98, 0
  %v130 = vsel %vm68, %v99, 0
  %132 = vmatpush.msra.mxu0 0.0
  %133 = vmatpush.msra.mxu0 0.0
  %134 = vmatpush.msra.mxu0 0.0
  %135 = vmatpush.msra.mxu0 0.0
  %136 = vmatpush.msra.mxu0 0.0
  %137 = vmatpush.msra.mxu0 0.0
  %138 = vmatpush.msra.mxu0 0.0
  %139 = vmatpush.msra.mxu0 0.0
  %140 = vmatpush.msra.mxu0 0.0
  %141 = vmatpush.msra.mxu0 0.0
  %142 = vmatpush.msra.mxu0 0.0
  %143 = vmatpush.msra.mxu0 0.0
  %144 = vmatpush.msra.mxu0 %v103
  %145 = vmatpush.msra.mxu0 %v102
  %146 = vmatpush.msra.mxu0 %v101
  %147 = vmatpush.msra.mxu0 %v100
  %148 = vmatmul.f32.gmra.mxu0 %v109
  %v149 = vpop.f32.mrf.mxu0
  %v150 = vadd.f32 %v106, %v149
  %151 = vmatmul.f32.gmra.mxu0 %v112
  %v152 = vpop.f32.mrf.mxu0
  %v153 = vadd.f32 %v106, %v152
  %154 = vmatmul.f32.gmra.mxu0 %v115
  %v155 = vpop.f32.mrf.mxu0
  %v156 = vadd.f32 %v106, %v155
  %157 = vmatmul.f32.gmra.mxu0 %v118
  %v158 = vpop.f32.mrf.mxu0
  %v159 = vadd.f32 %v106, %v158
  %160 = vmatmul.f32.gmra.mxu0 %v121
  %v161 = vpop.f32.mrf.mxu0
  %v162 = vadd.f32 %v106, %v161
  %163 = vmatmul.f32.gmra.mxu0 %v124
  %v164 = vpop.f32.mrf.mxu0
  %v165 = vadd.f32 %v106, %v164
  %166 = vmatmul.f32.gmra.mxu0 %v127
  %v167 = vpop.f32.mrf.mxu0
  %v168 = vadd.f32 %v106, %v167
  %169 = vmatmul.f32.gmra.mxu0 %v130
  %v170 = vpop.f32.mrf.mxu0
  %v171 = vadd.f32 %v106, %v170
  %172 = vdwg.mxu0
  %v174 = vperm.slane %v55, 0
  %v175 = vperm.slane %v55, 1
  %v179 = vsel %vm68, %v46, 0
  %181 = vmatpush.msra.mxu0 0.0
  %182 = vmatpush.msra.mxu0 0.0
  %183 = vmatpush.msra.mxu0 0.0
  %184 = vmatpush.msra.mxu0 0.0
  %185 = vmatpush.msra.mxu0 0.0
  %186 = vmatpush.msra.mxu0 0.0
  %187 = vmatpush.msra.mxu0 0.0
  %188 = vmatpush.msra.mxu0 0.0
  %189 = vmatpush.msra.mxu0 0.0
  %190 = vmatpush.msra.mxu0 0.0
  %191 = vmatpush.msra.mxu0 0.0
  %192 = vmatpush.msra.mxu0 0.0
  %193 = vmatpush.msra.mxu0 %v53
  %194 = vmatpush.msra.mxu0 %v51
  %195 = vmatpush.msra.mxu0 %v49
  %196 = vmatpush.msra.mxu0 %v47
  %197 = vmatmul.f32.gmra.mxu0 %v179
  %v198 = vpop.f32.mrf.mxu0
  %v199 = vadd.f32 %v174, %v198
  %200 = vdwg.mxu0
  %v201 = vadd.f32 %v90, %v199
  %v202 = vxor.u32 %v201, 2147483648
  %v203 = vmul.f32 %v202, 1.442695
  %v204 = vpow.pop %v203
  %v205 = vadd.f32 %v204, 1.0
  %v206 = vrcp.pop %v205
  %v207 = vmul.f32 %v205, %v206
  %v208 = vsub.f32 1.0, %v207
  %v209 = vmul.f32 %v206, %v208
  %v210 = vadd.f32 %v206, %v209
  %vm211 = vweird.f32 %v205
  %vm212 = vweird.f32 %v206
  %vm213 = vmor %vm211, %vm212
  %v214 = vsel %vm213, %v206, %v210
  %v215 = vand.u32 2147483647, %v205
  %vm216 = vcmp.eq.f32.partialorder %v215, 8.507059e+37
  %v217 = vand.u32 %v205, 2147483648
  %v218 = vor.u32 1.1754944e-38, %v217
  %v219 = vsel %vm216, %v218, %v214
  %v220 = vmul.f32 1.0, %v219
  %222 = vrot.lane.b32.xlu0 %v199, 64
  %v223 = vpop.permute.xlu0 %222
  %v225 = vmul.f32 %v220, %v223
  %227 = vrot.lane.b32.xlu0 %v225, 64
  %v228 = vpop.permute.xlu0 %227
  %v230 = vadd.f32 %v90, %v228
  %v231 = vtanh.pop %v230
  %v232 = vsub.f32 1.0, %v220
  %234 = vrot.lane.b32.xlu0 %v231, 96
  %v235 = vpop.permute.xlu0 %234
  %v237 = vmul.f32 %v232, %v235
  %238 = vrot.lane.b32.xlu0 %v46, 32
  %v239 = vpop.permute.xlu0 %238
  %v241 = vmul.f32 %v220, %v239
  %v242 = vadd.f32 %v237, %v241
  %244 = vrot.lane.b32.xlu0 %v242, 96
  %v245 = vpop.permute.xlu0 %244
  %v246 = vsel %vm68, %v245, 0
  %248 = vmatpush.msra.mxu0 0.0
  %249 = vmatpush.msra.mxu0 0.0
  %250 = vmatpush.msra.mxu0 0.0
  %251 = vmatpush.msra.mxu0 0.0
  %252 = vmatpush.msra.mxu0 0.0
  %253 = vmatpush.msra.mxu0 0.0
  %254 = vmatpush.msra.mxu0 0.0
  %255 = vmatpush.msra.mxu0 0.0
  %256 = vmatpush.msra.mxu0 0.0
  %257 = vmatpush.msra.mxu0 0.0
  %258 = vmatpush.msra.mxu0 0.0
  %259 = vmatpush.msra.mxu0 0.0
  %260 = vmatpush.msra.mxu0 %v53
  %261 = vmatpush.msra.mxu0 %v51
  %262 = vmatpush.msra.mxu0 %v49
  %263 = vmatpush.msra.mxu0 %v47
  %264 = vmatmul.f32.gmra.mxu0 %v246
  %v265 = vpop.f32.mrf.mxu0
  %v266 = vadd.f32 %v174, %v265
  %267 = vdwg.mxu0
  %268 = vmatpush.msra.mxu0 0.0
  %269 = vmatpush.msra.mxu0 0.0
  %270 = vmatpush.msra.mxu0 0.0
  %271 = vmatpush.msra.mxu0 0.0
  %272 = vmatpush.msra.mxu0 0.0
  %273 = vmatpush.msra.mxu0 0.0
  %274 = vmatpush.msra.mxu0 0.0
  %275 = vmatpush.msra.mxu0 0.0
  %276 = vmatpush.msra.mxu0 0.0
  %277 = vmatpush.msra.mxu0 0.0
  %278 = vmatpush.msra.mxu0 0.0
  %279 = vmatpush.msra.mxu0 0.0
  %280 = vmatpush.msra.mxu0 %v54
  %281 = vmatpush.msra.mxu0 %v52
  %282 = vmatpush.msra.mxu0 %v50
  %283 = vmatpush.msra.mxu0 %v48
  %284 = vmatmul.f32.gmra.mxu0 %v246
  %v285 = vpop.f32.mrf.mxu0
  %v286 = vadd.f32 %v175, %v285
  %287 = vdwg.mxu0
  %v288 = vmax.f32 %v286, 0.0
  %v290 = vrot.slane %v266, 1
  %v291 = vrot.slane %v266, 2
  %v292 = vrot.slane %v266, 3
  %v293 = vrot.slane %v266, 4
  %v294 = vrot.slane %v266, 5
  %v295 = vrot.slane %v266, 6
  %v296 = vrot.slane %v266, 7
  %v297 = vperm.slane %v266, 0
  %v298 = vperm.slane %v290, 0
  %v299 = vperm.slane %v291, 0
  %v300 = vperm.slane %v292, 0
  %v301 = vperm.slane %v293, 0
  %v302 = vperm.slane %v294, 0
  %v303 = vperm.slane %v295, 0
  %v304 = vperm.slane %v296, 0
  %321 = vrot.lane.b32.xlu0 %v150, 96
  %v322 = vpop.permute.xlu0 %321
  %323 = vrot.lane.b32.xlu0 %v153, 96
  %v324 = vpop.permute.xlu0 %323
  %325 = vrot.lane.b32.xlu0 %v156, 96
  %v326 = vpop.permute.xlu0 %325
  %327 = vrot.lane.b32.xlu0 %v159, 96
  %v328 = vpop.permute.xlu0 %327
  %329 = vrot.lane.b32.xlu0 %v162, 96
  %v330 = vpop.permute.xlu0 %329
  %331 = vrot.lane.b32.xlu0 %v165, 96
  %v332 = vpop.permute.xlu0 %331
  %333 = vrot.lane.b32.xlu0 %v168, 96
  %v334 = vpop.permute.xlu0 %333
  %335 = vrot.lane.b32.xlu0 %v171, 96
  %v336 = vpop.permute.xlu0 %335
  %v345 = vadd.f32 %v297, %v322
  %v346 = vadd.f32 %v298, %v324
  %v347 = vadd.f32 %v299, %v326
  %v348 = vadd.f32 %v300, %v328
  %v349 = vadd.f32 %v301, %v330
  %v350 = vadd.f32 %v302, %v332
  %v351 = vadd.f32 %v303, %v334
  %v352 = vadd.f32 %v304, %v336
  %v353 = vtanh.pop %v345
  %v354 = vtanh.pop %v346
  %v355 = vtanh.pop %v347
  %v356 = vtanh.pop %v348
  %v357 = vtanh.pop %v349
  %v358 = vtanh.pop %v350
  %v359 = vtanh.pop %v351
  %v360 = vtanh.pop %v352
  %v362 = vperm.slane %v56, 0
  %372 = vrot.lane.b32.xlu0 %v353, 32
  %v373 = vpop.permute.xlu0 %372
  %374 = vrot.lane.b32.xlu0 %v354, 32
  %v375 = vpop.permute.xlu0 %374
  %376 = vrot.lane.b32.xlu0 %v355, 32
  %v377 = vpop.permute.xlu0 %376
  %378 = vrot.lane.b32.xlu0 %v356, 32
  %v379 = vpop.permute.xlu0 %378
  %380 = vrot.lane.b32.xlu0 %v357, 32
  %v381 = vpop.permute.xlu0 %380
  %382 = vrot.lane.b32.xlu0 %v358, 32
  %v383 = vpop.permute.xlu0 %382
  %384 = vrot.lane.b32.xlu0 %v359, 32
  %v385 = vpop.permute.xlu0 %384
  %386 = vrot.lane.b32.xlu0 %v360, 32
  %v387 = vpop.permute.xlu0 %386
  %v396 = vmul.f32 %v362, %v373
  %v397 = vmul.f32 %v362, %v375
  %v398 = vmul.f32 %v362, %v377
  %v399 = vmul.f32 %v362, %v379
  %v400 = vmul.f32 %v362, %v381
  %v401 = vmul.f32 %v362, %v383
  %v402 = vmul.f32 %v362, %v385
  %v403 = vmul.f32 %v362, %v387
  %v404 = vsel %vm68, %v396, 0.0
  %405 = vadd.xlane.f32.xlu0 %v404
  %v406 = vpop.xlane.xlu0 %405
  %v407 = vsel %vm68, %v397, 0.0
  %408 = vadd.xlane.f32.xlu0 %v407
  %v409 = vpop.xlane.xlu0 %408
  %v410 = vsel %vm68, %v398, 0.0
  %411 = vadd.xlane.f32.xlu0 %v410
  %v412 = vpop.xlane.xlu0 %411
  %v413 = vsel %vm68, %v399, 0.0
  %414 = vadd.xlane.f32.xlu0 %v413
  %v415 = vpop.xlane.xlu0 %414
  %v416 = vsel %vm68, %v400, 0.0
  %417 = vadd.xlane.f32.xlu0 %v416
  %v418 = vpop.xlane.xlu0 %417
  %v419 = vsel %vm68, %v401, 0.0
  %420 = vadd.xlane.f32.xlu0 %v419
  %v421 = vpop.xlane.xlu0 %420
  %v422 = vsel %vm68, %v402, 0.0
  %423 = vadd.xlane.f32.xlu0 %v422
  %v424 = vpop.xlane.xlu0 %423
  %v425 = vsel %vm68, %v403, 0.0
  %426 = vadd.xlane.f32.xlu0 %v425
  %v427 = vpop.xlane.xlu0 %426
  %v429 = vperm.slane %v57, 0
  %v431 = vmul.f32 %v288, %v429
  %vm432 = vcmask 130048
  %v433 = vsel %vm432, %v431, 0.0
  %434 = vadd.xlane.f32.xlu0 %v433
  %v435 = vpop.xlane.xlu0 %434
  %v437 = vperm.slane %v58, 0
  %v439 = vadd.f32 %v435, %v437
  %v448 = vlaneseq
  %v449 = vand.u32 %v448, 127
  %v450 = vperm.slane %v406, %v449
  %v451 = vperm.slane %v409, %v449
  %v452 = vperm.slane %v412, %v449
  %v453 = vperm.slane %v415, %v449
  %v454 = vperm.slane %v418, %v449
  %v455 = vperm.slane %v421, %v449
  %v456 = vperm.slane %v424, %v449
  %v457 = vperm.slane %v427, %v449
  %vm458 = vcmask 1041409
  %v459 = vsel %vm458, %v451, %v450
  %vm460 = vcmask 1042434
  %v461 = vsel %vm460, %v452, %v459
  %vm462 = vcmask 1043459
  %v463 = vsel %vm462, %v453, %v461
  %vm464 = vcmask 1044484
  %v465 = vsel %vm464, %v454, %v463
  %vm466 = vcmask 1045509
  %v467 = vsel %vm466, %v455, %v465
  %vm468 = vcmask 1046534
  %v469 = vsel %vm468, %v456, %v467
  %vm470 = vcmask 1047559
  %v471 = vsel %vm470, %v457, %v469
  %vm473 = vcmask 64512
  %474 = vst.msk [vmem:[%s12] sm:$0xff] %vm473, %v471
  %vm475 = vcmask 7168
  %476 = vst.msk [vmem:[%s13] sm:$0xff] %vm475, %v439
  %v477 = vadd.f32 %v90, %v266
  %v478 = vxor.u32 %v477, 2147483648
  %v479 = vmul.f32 %v478, 1.442695
  %v480 = vpow.pop %v479
  %v481 = vadd.f32 %v480, 1.0
  %v482 = vrcp.pop %v481
  %v483 = vmul.f32 %v481, %v482
  %v484 = vsub.f32 1.0, %v483
  %v485 = vmul.f32 %v482, %v484
  %v486 = vadd.f32 %v482, %v485
  %vm487 = vweird.f32 %v481
  %vm488 = vweird.f32 %v482
  %vm489 = vmor %vm487, %vm488
  %v490 = vsel %vm489, %v482, %v486
  %v491 = vand.u32 2147483647, %v481
  %vm492 = vcmp.eq.f32.partialorder %v491, 8.507059e+37
  %v493 = vand.u32 %v481, 2147483648
  %v494 = vor.u32 1.1754944e-38, %v493
  %v495 = vsel %vm492, %v494, %v490
  %v496 = vmul.f32 1.0, %v495
  %497 = vrot.lane.b32.xlu0 %v266, 64
  %v498 = vpop.permute.xlu0 %497
  %v500 = vmul.f32 %v496, %v498
  %502 = vrot.lane.b32.xlu0 %v500, 64
  %v503 = vpop.permute.xlu0 %502
  %v505 = vadd.f32 %v90, %v503
  %v506 = vtanh.pop %v505
  %v507 = vsub.f32 1.0, %v496
  %509 = vrot.lane.b32.xlu0 %v506, 96
  %v510 = vpop.permute.xlu0 %509
  %v512 = vmul.f32 %v507, %v510
  %v513 = vmul.f32 %v496, %v242
  %v514 = vadd.f32 %v512, %v513
  %516 = vrot.lane.b32.xlu0 %v514, 96
  %v517 = vpop.permute.xlu0 %516
  %v518 = vsel %vm68, %v517, 0
  %520 = vmatpush.msra.mxu0 0.0
  %521 = vmatpush.msra.mxu0 0.0
  %522 = vmatpush.msra.mxu0 0.0
  %523 = vmatpush.msra.mxu0 0.0
  %524 = vmatpush.msra.mxu0 0.0
  %525 = vmatpush.msra.mxu0 0.0
  %526 = vmatpush.msra.mxu0 0.0
  %527 = vmatpush.msra.mxu0 0.0
  %528 = vmatpush.msra.mxu0 0.0
  %529 = vmatpush.msra.mxu0 0.0
  %530 = vmatpush.msra.mxu0 0.0
  %531 = vmatpush.msra.mxu0 0.0
  %532 = vmatpush.msra.mxu0 %v53
  %533 = vmatpush.msra.mxu0 %v51
  %534 = vmatpush.msra.mxu0 %v49
  %535 = vmatpush.msra.mxu0 %v47
  %536 = vmatmul.f32.gmra.mxu0 %v518
  %v537 = vpop.f32.mrf.mxu0
  %v538 = vadd.f32 %v174, %v537
  %539 = vdwg.mxu0
  %540 = vmatpush.msra.mxu0 0.0
  %541 = vmatpush.msra.mxu0 0.0
  %542 = vmatpush.msra.mxu0 0.0
  %543 = vmatpush.msra.mxu0 0.0
  %544 = vmatpush.msra.mxu0 0.0
  %545 = vmatpush.msra.mxu0 0.0
  %546 = vmatpush.msra.mxu0 0.0
  %547 = vmatpush.msra.mxu0 0.0
  %548 = vmatpush.msra.mxu0 0.0
  %549 = vmatpush.msra.mxu0 0.0
  %550 = vmatpush.msra.mxu0 0.0
  %551 = vmatpush.msra.mxu0 0.0
  %552 = vmatpush.msra.mxu0 %v54
  %553 = vmatpush.msra.mxu0 %v52
  %554 = vmatpush.msra.mxu0 %v50
  %555 = vmatpush.msra.mxu0 %v48
  %556 = vmatmul.f32.gmra.mxu0 %v518
  %v557 = vpop.f32.mrf.mxu0
  %v558 = vadd.f32 %v175, %v557
  %559 = vdwg.mxu0
  %v560 = vmax.f32 %v558, 0.0
  %v562 = vrot.slane %v538, 1
  %v563 = vrot.slane %v538, 2
  %v564 = vrot.slane %v538, 3
  %v565 = vrot.slane %v538, 4
  %v566 = vrot.slane %v538, 5
  %v567 = vrot.slane %v538, 6
  %v568 = vrot.slane %v538, 7
  %v569 = vperm.slane %v538, 0
  %v570 = vperm.slane %v562, 0
  %v571 = vperm.slane %v563, 0
  %v572 = vperm.slane %v564, 0
  %v573 = vperm.slane %v565, 0
  %v574 = vperm.slane %v566, 0
  %v575 = vperm.slane %v567, 0
  %v576 = vperm.slane %v568, 0
  %v585 = vadd.f32 %v569, %v322
  %v586 = vadd.f32 %v570, %v324
  %v587 = vadd.f32 %v571, %v326
  %v588 = vadd.f32 %v572, %v328
  %v589 = vadd.f32 %v573, %v330
  %v590 = vadd.f32 %v574, %v332
  %v591 = vadd.f32 %v575, %v334
  %v592 = vadd.f32 %v576, %v336
  %v593 = vtanh.pop %v585
  %v594 = vtanh.pop %v586
  %v595 = vtanh.pop %v587
  %v596 = vtanh.pop %v588
  %v597 = vtanh.pop %v589
  %v598 = vtanh.pop %v590
  %v599 = vtanh.pop %v591
  %v600 = vtanh.pop %v592
  %609 = vrot.lane.b32.xlu0 %v593, 32
  %v610 = vpop.permute.xlu0 %609
  %611 = vrot.lane.b32.xlu0 %v594, 32
  %v612 = vpop.permute.xlu0 %611
  %613 = vrot.lane.b32.xlu0 %v595, 32
  %v614 = vpop.permute.xlu0 %613
  %615 = vrot.lane.b32.xlu0 %v596, 32
  %v616 = vpop.permute.xlu0 %615
  %617 = vrot.lane.b32.xlu0 %v597, 32
  %v618 = vpop.permute.xlu0 %617
  %619 = vrot.lane.b32.xlu0 %v598, 32
  %v620 = vpop.permute.xlu0 %619
  %621 = vrot.lane.b32.xlu0 %v599, 32
  %v622 = vpop.permute.xlu0 %621
  %623 = vrot.lane.b32.xlu0 %v600, 32
  %v624 = vpop.permute.xlu0 %623
  %v633 = vmul.f32 %v362, %v610
  %v634 = vmul.f32 %v362, %v612
  %v635 = vmul.f32 %v362, %v614
  %v636 = vmul.f32 %v362, %v616
  %v637 = vmul.f32 %v362, %v618
  %v638 = vmul.f32 %v362, %v620
  %v639 = vmul.f32 %v362, %v622
  %v640 = vmul.f32 %v362, %v624
  %v641 = vsel %vm68, %v633, 0.0
  %642 = vadd.xlane.f32.xlu0 %v641
  %v643 = vpop.xlane.xlu0 %642
  %v644 = vsel %vm68, %v634, 0.0
  %645 = vadd.xlane.f32.xlu0 %v644
  %v646 = vpop.xlane.xlu0 %645
  %v647 = vsel %vm68, %v635, 0.0
  %648 = vadd.xlane.f32.xlu0 %v647
  %v649 = vpop.xlane.xlu0 %648
  %v650 = vsel %vm68, %v636, 0.0
  %651 = vadd.xlane.f32.xlu0 %v650
  %v652 = vpop.xlane.xlu0 %651
  %v653 = vsel %vm68, %v637, 0.0
  %654 = vadd.xlane.f32.xlu0 %v653
  %v655 = vpop.xlane.xlu0 %654
  %v656 = vsel %vm68, %v638, 0.0
  %657 = vadd.xlane.f32.xlu0 %v656
  %v658 = vpop.xlane.xlu0 %657
  %v659 = vsel %vm68, %v639, 0.0
  %660 = vadd.xlane.f32.xlu0 %v659
  %v661 = vpop.xlane.xlu0 %660
  %v662 = vsel %vm68, %v640, 0.0
  %663 = vadd.xlane.f32.xlu0 %v662
  %v664 = vpop.xlane.xlu0 %663
  %v665 = vmul.f32 %v560, %v429
  %v666 = vsel %vm432, %v665, 0.0
  %667 = vadd.xlane.f32.xlu0 %v666
  %v668 = vpop.xlane.xlu0 %667
  %v669 = vadd.f32 %v668, %v437
  %v678 = vperm.slane %v643, %v449
  %v679 = vperm.slane %v646, %v449
  %v680 = vperm.slane %v649, %v449
  %v681 = vperm.slane %v652, %v449
  %v682 = vperm.slane %v655, %v449
  %v683 = vperm.slane %v658, %v449
  %v684 = vperm.slane %v661, %v449
  %v685 = vperm.slane %v664, %v449
  %v686 = vsel %vm458, %v679, %v678
  %v687 = vsel %vm460, %v680, %v686
  %v688 = vsel %vm462, %v681, %v687
  %v689 = vsel %vm464, %v682, %v688
  %v690 = vsel %vm466, %v683, %v689
  %v691 = vsel %vm468, %v684, %v690
  %v692 = vsel %vm470, %v685, %v691
  %s694 = scalar_lea.vmem %s12, 8
  %695 = vst.msk [vmem:[%s694] sm:$0xff] %vm473, %v692
  %s696 = scalar_lea.vmem %s13, 8
  %697 = vst.msk [vmem:[%s696] sm:$0xff] %vm475, %v669
  %v698 = vadd.f32 %v90, %v538
  %v699 = vxor.u32 %v698, 2147483648
  %v700 = vmul.f32 %v699, 1.442695
  %v701 = vpow.pop %v700
  %v702 = vadd.f32 %v701, 1.0
  %v703 = vrcp.pop %v702
  %v704 = vmul.f32 %v702, %v703
  %v705 = vsub.f32 1.0, %v704
  %v706 = vmul.f32 %v703, %v705
  %v707 = vadd.f32 %v703, %v706
  %vm708 = vweird.f32 %v702
  %vm709 = vweird.f32 %v703
  %vm710 = vmor %vm708, %vm709
  %v711 = vsel %vm710, %v703, %v707
  %v712 = vand.u32 2147483647, %v702
  %vm713 = vcmp.eq.f32.partialorder %v712, 8.507059e+37
  %v714 = vand.u32 %v702, 2147483648
  %v715 = vor.u32 1.1754944e-38, %v714
  %v716 = vsel %vm713, %v715, %v711
  %v717 = vmul.f32 1.0, %v716
  %718 = vrot.lane.b32.xlu0 %v538, 64
  %v719 = vpop.permute.xlu0 %718
  %v721 = vmul.f32 %v717, %v719
  %723 = vrot.lane.b32.xlu0 %v721, 64
  %v724 = vpop.permute.xlu0 %723
  %v726 = vadd.f32 %v90, %v724
  %v727 = vtanh.pop %v726
  %v728 = vsub.f32 1.0, %v717
  %730 = vrot.lane.b32.xlu0 %v727, 96
  %v731 = vpop.permute.xlu0 %730
  %v733 = vmul.f32 %v728, %v731
  %v734 = vmul.f32 %v717, %v514
  %v735 = vadd.f32 %v733, %v734
  %737 = vrot.lane.b32.xlu0 %v735, 96
  %v738 = vpop.permute.xlu0 %737
  %v739 = vsel %vm68, %v738, 0
  %741 = vmatpush.msra.mxu0 0.0
  %742 = vmatpush.msra.mxu0 0.0
  %743 = vmatpush.msra.mxu0 0.0
  %744 = vmatpush.msra.mxu0 0.0
  %745 = vmatpush.msra.mxu0 0.0
  %746 = vmatpush.msra.mxu0 0.0
  %747 = vmatpush.msra.mxu0 0.0
  %748 = vmatpush.msra.mxu0 0.0
  %749 = vmatpush.msra.mxu0 0.0
  %750 = vmatpush.msra.mxu0 0.0
  %751 = vmatpush.msra.mxu0 0.0
  %752 = vmatpush.msra.mxu0 0.0
  %753 = vmatpush.msra.mxu0 %v53
  %754 = vmatpush.msra.mxu0 %v51
  %755 = vmatpush.msra.mxu0 %v49
  %756 = vmatpush.msra.mxu0 %v47
  %757 = vmatmul.f32.gmra.mxu0 %v739
  %v758 = vpop.f32.mrf.mxu0
  %v759 = vadd.f32 %v174, %v758
  %760 = vdwg.mxu0
  %761 = vmatpush.msra.mxu0 0.0
  %762 = vmatpush.msra.mxu0 0.0
  %763 = vmatpush.msra.mxu0 0.0
  %764 = vmatpush.msra.mxu0 0.0
  %765 = vmatpush.msra.mxu0 0.0
  %766 = vmatpush.msra.mxu0 0.0
  %767 = vmatpush.msra.mxu0 0.0
  %768 = vmatpush.msra.mxu0 0.0
  %769 = vmatpush.msra.mxu0 0.0
  %770 = vmatpush.msra.mxu0 0.0
  %771 = vmatpush.msra.mxu0 0.0
  %772 = vmatpush.msra.mxu0 0.0
  %773 = vmatpush.msra.mxu0 %v54
  %774 = vmatpush.msra.mxu0 %v52
  %775 = vmatpush.msra.mxu0 %v50
  %776 = vmatpush.msra.mxu0 %v48
  %777 = vmatmul.f32.gmra.mxu0 %v739
  %v778 = vpop.f32.mrf.mxu0
  %v779 = vadd.f32 %v175, %v778
  %780 = vdwg.mxu0
  %v781 = vmax.f32 %v779, 0.0
  %v783 = vrot.slane %v759, 1
  %v784 = vrot.slane %v759, 2
  %v785 = vrot.slane %v759, 3
  %v786 = vrot.slane %v759, 4
  %v787 = vrot.slane %v759, 5
  %v788 = vrot.slane %v759, 6
  %v789 = vrot.slane %v759, 7
  %v790 = vperm.slane %v759, 0
  %v791 = vperm.slane %v783, 0
  %v792 = vperm.slane %v784, 0
  %v793 = vperm.slane %v785, 0
  %v794 = vperm.slane %v786, 0
  %v795 = vperm.slane %v787, 0
  %v796 = vperm.slane %v788, 0
  %v797 = vperm.slane %v789, 0
  %v806 = vadd.f32 %v790, %v322
  %v807 = vadd.f32 %v791, %v324
  %v808 = vadd.f32 %v792, %v326
  %v809 = vadd.f32 %v793, %v328
  %v810 = vadd.f32 %v794, %v330
  %v811 = vadd.f32 %v795, %v332
  %v812 = vadd.f32 %v796, %v334
  %v813 = vadd.f32 %v797, %v336
  %v814 = vtanh.pop %v806
  %v815 = vtanh.pop %v807
  %v816 = vtanh.pop %v808
  %v817 = vtanh.pop %v809
  %v818 = vtanh.pop %v810
  %v819 = vtanh.pop %v811
  %v820 = vtanh.pop %v812
  %v821 = vtanh.pop %v813
  %830 = vrot.lane.b32.xlu0 %v814, 32
  %v831 = vpop.permute.xlu0 %830
  %832 = vrot.lane.b32.xlu0 %v815, 32
  %v833 = vpop.permute.xlu0 %832
  %834 = vrot.lane.b32.xlu0 %v816, 32
  %v835 = vpop.permute.xlu0 %834
  %836 = vrot.lane.b32.xlu0 %v817, 32
  %v837 = vpop.permute.xlu0 %836
  %838 = vrot.lane.b32.xlu0 %v818, 32
  %v839 = vpop.permute.xlu0 %838
  %840 = vrot.lane.b32.xlu0 %v819, 32
  %v841 = vpop.permute.xlu0 %840
  %842 = vrot.lane.b32.xlu0 %v820, 32
  %v843 = vpop.permute.xlu0 %842
  %844 = vrot.lane.b32.xlu0 %v821, 32
  %v845 = vpop.permute.xlu0 %844
  %v854 = vmul.f32 %v362, %v831
  %v855 = vmul.f32 %v362, %v833
  %v856 = vmul.f32 %v362, %v835
  %v857 = vmul.f32 %v362, %v837
  %v858 = vmul.f32 %v362, %v839
  %v859 = vmul.f32 %v362, %v841
  %v860 = vmul.f32 %v362, %v843
  %v861 = vmul.f32 %v362, %v845
  %v862 = vsel %vm68, %v854, 0.0
  %863 = vadd.xlane.f32.xlu0 %v862
  %v864 = vpop.xlane.xlu0 %863
  %v865 = vsel %vm68, %v855, 0.0
  %866 = vadd.xlane.f32.xlu0 %v865
  %v867 = vpop.xlane.xlu0 %866
  %v868 = vsel %vm68, %v856, 0.0
  %869 = vadd.xlane.f32.xlu0 %v868
  %v870 = vpop.xlane.xlu0 %869
  %v871 = vsel %vm68, %v857, 0.0
  %872 = vadd.xlane.f32.xlu0 %v871
  %v873 = vpop.xlane.xlu0 %872
  %v874 = vsel %vm68, %v858, 0.0
  %875 = vadd.xlane.f32.xlu0 %v874
  %v876 = vpop.xlane.xlu0 %875
  %v877 = vsel %vm68, %v859, 0.0
  %878 = vadd.xlane.f32.xlu0 %v877
  %v879 = vpop.xlane.xlu0 %878
  %v880 = vsel %vm68, %v860, 0.0
  %881 = vadd.xlane.f32.xlu0 %v880
  %v882 = vpop.xlane.xlu0 %881
  %v883 = vsel %vm68, %v861, 0.0
  %884 = vadd.xlane.f32.xlu0 %v883
  %v885 = vpop.xlane.xlu0 %884
  %v886 = vmul.f32 %v781, %v429
  %v887 = vsel %vm432, %v886, 0.0
  %888 = vadd.xlane.f32.xlu0 %v887
  %v889 = vpop.xlane.xlu0 %888
  %v890 = vadd.f32 %v889, %v437
  %v899 = vperm.slane %v864, %v449
  %v900 = vperm.slane %v867, %v449
  %v901 = vperm.slane %v870, %v449
  %v902 = vperm.slane %v873, %v449
  %v903 = vperm.slane %v876, %v449
  %v904 = vperm.slane %v879, %v449
  %v905 = vperm.slane %v882, %v449
  %v906 = vperm.slane %v885, %v449
  %v907 = vsel %vm458, %v900, %v899
  %v908 = vsel %vm460, %v901, %v907
  %v909 = vsel %vm462, %v902, %v908
  %v910 = vsel %vm464, %v903, %v909
  %v911 = vsel %vm466, %v904, %v910
  %v912 = vsel %vm468, %v905, %v911
  %v913 = vsel %vm470, %v906, %v912
  %s915 = scalar_lea.vmem %s12, 16
  %916 = vst.msk [vmem:[%s915] sm:$0xff] %vm473, %v913
  %s917 = scalar_lea.vmem %s13, 16
  %918 = vst.msk [vmem:[%s917] sm:$0xff] %vm475, %v890
  %920 = vst.msk [vmem:[%s14] sm:$0xff] %vm68, %v738
  // Predicated region
  $region50: #{decoder_forward.1} parent=0 // pred_check
    _
  $region51: #{decoder_forward.1} parent=0 // pred_check_branch
    %922 = sbr.rel (0) target = $region53
  $region52: #{decoder_forward.1} parent=0 // pred_region
    _
  $region53: #{decoder_forward.1} parent=0 // pred_fallthru
    _
  // Predicated region
  $region54: #{decoder_forward.1} parent=0 // pred_check
    _
  $region55: #{decoder_forward.1} parent=0 // pred_check_branch
    %924 = sbr.rel (0) target = $region57
  $region56: #{decoder_forward.1} parent=0 // pred_region
    _
  $region57: #{decoder_forward.1} parent=0 // pred_fallthru
    _
  // Predicated region
  $region58: #{decoder_forward.1} parent=0 // pred_check
    _
  $region59: #{decoder_forward.1} parent=0 // pred_check_branch
    %926 = sbr.rel (0) target = $region61
  $region60: #{decoder_forward.1} parent=0 // pred_region
    _
  $region61: #{decoder_forward.1} parent=0 // pred_fallthru
    _
  // Predicated region
  $region62: #{decoder_forward.1} parent=0 // pred_check
    _
  $region63: #{decoder_forward.1} parent=0 // pred_check_branch
    %928 = sbr.rel (0) target = $region65
  $region64: #{decoder_forward.1} parent=0 // pred_region
    _
  $region65: #{decoder_forward.1} parent=0 // pred_fallthru
    _
  // Predicated region
  $region66: #{decoder_forward.1} parent=0 // pred_check
    _
  $region67: #{decoder_forward.1} parent=0 // pred_check_branch
    %930 = sbr.rel (0) target = $region69
  $region68: #{decoder_forward.1} parent=0 // pred_region
    _
  $region69: #{decoder_forward.1} parent=0 // pred_fallthru
    _
  // Predicated region
  $region70: #{decoder_forward.1} parent=0 // pred_check
    _
  $region71: #{decoder_forward.1} parent=0 // pred_check_branch
    %932 = sbr.rel (0) target = $region73
  $region72: #{decoder_forward.1} parent=0 // pred_region
    _
  $region73: #{decoder_forward.1} parent=0 // pred_fallthru
    _

</llo_original>
